<compile_context>
chip_gen: v7x
topology: tpu7x:2x2x1
jax: 0.10.0
libtpu: 0.0.40
codegen_flags: <defaults>
</compile_context>

<pallas_src>
import functools
import math

import jax
import jax.numpy as jnp
from jax.experimental import pallas as pl
from jax.experimental.pallas import tpu as pltpu


def _soft_ce_kernel(pred_ref, target_ref, ce_ref, *, n_rows, tm):
    """One grid step: (TM, C) tile of pred/target -> lane-dense (1, 1, TM) CE row."""
    p = pred_ref[...].astype(jnp.float32)      # (TM, C)
    t = target_ref[...].astype(jnp.float32)    # (TM, C)

    m = jnp.max(p, axis=-1, keepdims=True)                          # (TM, 1)
    lse = jnp.log(jnp.sum(jnp.exp(p - m), axis=-1, keepdims=True))  # (TM, 1)
    # Per-element form (subtract before summing): numerically safer than
    # (m + lse) * sum(t) - sum(t * p) for large-magnitude logits; identical to
    # -sum(t * log_softmax(p)).
    ce = jnp.sum(t * ((m + lse) - p), axis=-1, keepdims=True)       # (TM, 1)

    # Ragged tail: rows >= n_rows in the last block are garbage reads (no
    # wrapper-side padding) -> force exactly 0 so no NaN/Inf ever escapes.
    base = pl.program_id(0) * tm
    row = jax.lax.broadcasted_iota(jnp.int32, (tm, 1), 0) + base
    ce = jnp.where(row < n_rows, ce, 0.0)

    # Lane-dense store: relayout the (TM, 1) column into a (1, 1, TM) row so the
    # output DMA uses unmasked full-lane stores (XLU has slack in this kernel).
    ce_ref[...] = jnp.transpose(ce).reshape(1, 1, tm)


def _pick_tile(n_rows, c, itemsize, vmem_cap):
    """Choose row-tile TM and grid size.

    Targets:
      * ~4 MiB of DMA'd input per grid step (amortizes ~0.35 us/step overhead),
      * a VMEM budget covering double-buffered native-dtype DMA blocks PLUS the
        in-kernel f32 working set (upcasts + temporaries),
      * grid >= ~4 whenever the row count allows it (megacore sharding on v7x,
        input prefetch overlap on all generations),
      * TM a multiple of the dtype's sublane granule (or the full row count).
    """
    sub = max(8, 32 // itemsize)                # 8 f32 / 16 bf16 / 32 int8
    if n_rows <= 2 * sub:
        return n_rows, 1                        # single full-array block (always legal)

    # Per-step input-bytes target: ~4 MiB across both inputs.
    tm_step = (4 << 20) // max(2 * c * itemsize, 1)

    # VMEM: 2 inputs x 2 pipeline buffers (native dtype) + ~3 f32 temporaries
    # per class + double-buffered f32 output, per row.
    per_row = 4 * c * itemsize + 12 * c + 16
    budget = min(40 << 20, int(0.55 * vmem_cap))
    tm_vmem = budget // max(per_row, 1)
    if tm_vmem < 64 and vmem_cap >= (100 << 20):
        # v5e/v6e (128 MiB VMEM) with very large C: spend more VMEM rather than
        # shrinking TM below a healthy size.  Do NOT mirror on v7x (64 MiB).
        budget = int(0.65 * vmem_cap)
        tm_vmem = budget // max(per_row, 1)

    # Keep at least ~4 grid steps so both v7x TensorCores get work and the
    # BlockSpec pipeline has something to prefetch.
    tm_par = -(-n_rows // 4)

    tm = max(sub, min(tm_step, tm_vmem, tm_par))
    tm = max(sub, (tm // sub) * sub)
    grid = -(-n_rows // tm)
    return tm, grid


def soft_target_cross_entropy(pred, target, *, reduction="mean"):
    """Pallas TPU implementation of SoftTargetCrossEntropyLoss.forward."""
    assert pred.shape == target.shape, (pred.shape, target.shape)
    *lead, c = pred.shape
    n = math.prod(lead) if lead else 1

    pred2 = pred.reshape(n, c)
    target2 = target.reshape(n, c)
    itemsize = pred2.dtype.itemsize

    try:
        vmem_cap = int(pltpu.get_tpu_info().vmem_capacity_bytes)
    except Exception:
        vmem_cap = 64 << 20                     # conservative (v7x-sized) fallback

    # TODO(synk): for vocab-scale C (f32 C >~ 1e5) chunk C inside the kernel
    # instead of relying on one (TM, C) block; irrelevant for tuplan mode counts.
    tm, grid = _pick_tile(n, c, itemsize, vmem_cap)

    # Double-buffered DMA inputs + in-kernel f32 working set + output + headroom.
    vmem_need = tm * (4 * c * itemsize + 12 * c) + 4 * tm * 4 + (2 << 20)
    vmem_limit = int(min(max(vmem_need, 16 << 20), int(0.75 * vmem_cap)))

    kernel = functools.partial(_soft_ce_kernel, n_rows=n, tm=tm)

    ce = pl.pallas_call(
        kernel,
        out_shape=jax.ShapeDtypeStruct((grid, 1, tm), jnp.float32),
        grid_spec=pltpu.PrefetchScalarGridSpec(
            num_scalar_prefetch=0,
            grid=(grid,),
            in_specs=[
                pl.BlockSpec((tm, c), lambda i: (i, 0)),
                pl.BlockSpec((tm, c), lambda i: (i, 0)),
            ],
            out_specs=pl.BlockSpec((1, 1, tm), lambda i: (i, 0, 0)),
        ),
        compiler_params=pltpu.CompilerParams(
            dimension_semantics=("parallel",),   # independent blocks -> 2 TCs on v7x
            vmem_limit_bytes=vmem_limit,
        ),
    )(pred2, target2)

    ce = ce.reshape(grid * tm)[:n]
    if reduction == "mean":
        return jnp.mean(ce)
    elif reduction == "sum":
        return jnp.sum(ce)
    elif reduction == "none":
        return ce.reshape(tuple(lead))
    else:
        raise ValueError("{} is not a valid value for reduction".format(reduction))


def _reference_rows(pred, target):
    log_sm = jax.nn.log_softmax(pred.astype(jnp.float32), axis=-1)
    return jnp.sum(-target.astype(jnp.float32) * log_sm, axis=-1)


if __name__ == "__main__":
    key = jax.random.PRNGKey(0)
    k1, k2, k3, k4 = jax.random.split(key, 4)

    # (batch=2, modes=6, classes=256) -> 12 rows: small single-block path.
    B, M, C = 2, 6, 256
    pred = jax.random.normal(k1, (B, M, C), dtype=jnp.float32)
    target = jax.nn.softmax(jax.random.normal(k2, (B, M, C), dtype=jnp.float32), axis=-1)
    ce_ref = _reference_rows(pred, target)

    loss_mean = jax.block_until_ready(soft_target_cross_entropy(pred, target, reduction="mean"))
    loss_sum = jax.block_until_ready(soft_target_cross_entropy(pred, target, reduction="sum"))
    ce_none = jax.block_until_ready(soft_target_cross_entropy(pred, target, reduction="none"))

    assert jnp.allclose(loss_mean, jnp.mean(ce_ref), rtol=1e-5, atol=1e-5), (loss_mean, jnp.mean(ce_ref))
    assert jnp.allclose(loss_sum, jnp.sum(ce_ref), rtol=1e-5, atol=1e-5), (loss_sum, jnp.sum(ce_ref))
    assert jnp.allclose(ce_none, ce_ref, rtol=1e-5, atol=1e-5)

    # Ragged multi-block path: 3*37 = 111 rows; TM will not divide it, tail is
    # masked in-kernel (no jnp.pad copies of the inputs).
    B2, M2, C2 = 3, 37, 128
    pred_r = jax.random.normal(k3, (B2, M2, C2), dtype=jnp.float32)
    target_r = jax.nn.softmax(jax.random.normal(k4, (B2, M2, C2), dtype=jnp.float32), axis=-1)
    ce_ref_r = _reference_rows(pred_r, target_r)
    ce_none_r = jax.block_until_ready(soft_target_cross_entropy(pred_r, target_r, reduction="none"))
    loss_mean_r = jax.block_until_ready(soft_target_cross_entropy(pred_r, target_r, reduction="mean"))
    assert jnp.allclose(ce_none_r, ce_ref_r, rtol=1e-5, atol=1e-5)
    assert jnp.allclose(loss_mean_r, jnp.mean(ce_ref_r), rtol=1e-5, atol=1e-5)

    # bf16 inputs are DMA'd as bf16 (half the HBM traffic) and upcast in-kernel.
    pred_bf = pred.astype(jnp.bfloat16)
    target_bf = target.astype(jnp.bfloat16)
    loss_bf = jax.block_until_ready(soft_target_cross_entropy(pred_bf, target_bf))
    ref_bf = jnp.mean(_reference_rows(pred_bf, target_bf))
    assert jnp.allclose(loss_bf, ref_bf, rtol=1e-3, atol=1e-3), (loss_bf, ref_bf)

    print("KERNEL_OK")
</pallas_src>

<mosaic_0001>
module attributes {stable_mosaic.version = 11 : i64} {
  func.func @_soft_ce_kernel(%arg0: i32, %arg1: memref<12x256xf32, #tpu.memory_space<vmem>>, %arg2: memref<12x256xf32, #tpu.memory_space<vmem>>, %arg3: memref<1x1x12xf32, #tpu.memory_space<vmem>>) attributes {dimension_semantics = [#tpu.dimension_semantics<parallel>], iteration_bounds = array<i64: 1>, scalar_prefetch = 0 : i64, scratch_operands = 0 : i64, tpu.core_type = #tpu.core_type<tc>, window_params = [{transform_indices = @transform_0, window_bounds = array<i64: 12, 256>}, {transform_indices = @transform_1, window_bounds = array<i64: 12, 256>}, {transform_indices = @transform_2, window_bounds = array<i64: 1, 1, 12>}]} {
    %c0 = arith.constant 0 : index
    %c0_0 = arith.constant 0 : index
    %0 = vector.load %arg1[%c0, %c0_0] : memref<12x256xf32, #tpu.memory_space<vmem>>, vector<12x256xf32>
    %c0_1 = arith.constant 0 : index
    %c0_2 = arith.constant 0 : index
    %1 = vector.load %arg2[%c0_1, %c0_2] : memref<12x256xf32, #tpu.memory_space<vmem>>, vector<12x256xf32>
    %cst = arith.constant dense<0xFF800000> : vector<12xf32>
    %2 = vector.multi_reduction <maximumf>, %0, %cst [1] : vector<12x256xf32> to vector<12xf32>
    %3 = vector.shape_cast %2 : vector<12xf32> to vector<12x1xf32>
    %4 = vector.broadcast %3 : vector<12x1xf32> to vector<12x256xf32>
    %5 = arith.subf %0, %4 : vector<12x256xf32>
    %6 = math.exp %5 : vector<12x256xf32>
    %cst_3 = arith.constant dense<0.000000e+00> : vector<12xf32>
    %7 = vector.multi_reduction <add>, %6, %cst_3 [1] : vector<12x256xf32> to vector<12xf32>
    %8 = vector.shape_cast %7 : vector<12xf32> to vector<12x1xf32>
    %9 = math.log %8 : vector<12x1xf32>
    %10 = arith.addf %3, %9 : vector<12x1xf32>
    %11 = vector.broadcast %10 : vector<12x1xf32> to vector<12x256xf32>
    %12 = arith.subf %11, %0 : vector<12x256xf32>
    %13 = arith.mulf %1, %12 : vector<12x256xf32>
    %cst_4 = arith.constant dense<0.000000e+00> : vector<12xf32>
    %14 = vector.multi_reduction <add>, %13, %cst_4 [1] : vector<12x256xf32> to vector<12xf32>
    %15 = vector.shape_cast %14 : vector<12xf32> to vector<12x1xf32>
    %c12_i32 = arith.constant 12 : i32
    %16 = arith.muli %arg0, %c12_i32 : i32
    %17 = tpu.iota {dimensions = array<i32: 0>} : vector<12x1xi32>
    %18 = vector.broadcast %16 : i32 to vector<12x1xi32>
    %19 = arith.addi %17, %18 : vector<12x1xi32>
    %c12_i32_5 = arith.constant 12 : i32
    %20 = vector.broadcast %c12_i32_5 : i32 to vector<12x1xi32>
    %21 = arith.cmpi slt, %19, %20 : vector<12x1xi32>
    %cst_6 = arith.constant 0.000000e+00 : f32
    %22 = vector.broadcast %cst_6 : f32 to vector<12x1xf32>
    %23 = arith.select %21, %15, %22 : vector<12x1xi1>, vector<12x1xf32>
    %24 = tpu.transpose %23, [1, 0] : vector<12x1xf32> -> vector<1x12xf32>
    %25 = vector.shape_cast %24 : vector<1x12xf32> to vector<1x1x12xf32>
    %c0_7 = arith.constant 0 : index
    %c0_8 = arith.constant 0 : index
    %c0_9 = arith.constant 0 : index
    %26 = vector.load %arg3[%c0_7, %c0_8, %c0_9] : memref<1x1x12xf32, #tpu.memory_space<vmem>>, vector<1x1x12xf32>
    tpu.vector_store %arg3[%c0_7, %c0_8, %c0_9], %25 {strides = array<i32>} : memref<1x1x12xf32, #tpu.memory_space<vmem>>, vector<1x1x12xf32>,
    return
  }
  func.func @transform_0(%arg0: i32) -> (i32, i32) {
    %c0_i32 = arith.constant 0 : i32
    %c0_i32_0 = arith.constant 0 : i32
    return %arg0, %c0_i32 : i32, i32
  }
  func.func @transform_1(%arg0: i32) -> (i32, i32) {
    %c0_i32 = arith.constant 0 : i32
    %c0_i32_0 = arith.constant 0 : i32
    return %arg0, %c0_i32 : i32, i32
  }
  func.func @transform_2(%arg0: i32) -> (i32, i32, i32) {
    %c0_i32 = arith.constant 0 : i32
    %c0_i32_0 = arith.constant 0 : i32
    %c0_i32_1 = arith.constant 0 : i32
    return %arg0, %c0_i32, %c0_i32_0 : i32, i32, i32
  }
}

</mosaic_0001>

<llo_original>
// kernel: tpu_custom_call.1
$region0: #{tpu_custom_call.1}
  #allocation0 [shape = 'u32[]', space=smem, size = 0x4, offset = 0x4, fixed_abs, tag = 'smem constant byte address 0x4 - core index']
  #allocation1 [shape = 'u32[144,128]{1,0:T(1,128)}', space=vmem, size = 0x12000, scoped, tag = 'internal scratch']
  %s0 = inlined_call_operand.hbm [shape: f32[12,256], index: 0, kind: input, shape index: {}]
  %s1 = inlined_call_operand.hbm [shape: f32[12,256], index: 1, kind: input, shape index: {}]
  %s2 = inlined_call_operand.hbm [shape: f32[1,1,12], index: 2, kind: output, shape index: {}]
  %s3 = sld [smem:[#allocation0]]
  $region26: #{tpu_custom_call.1} parent=0
    _
  %s5 = ssub.s32 1, %s3
  %s6 = scalar_select 0, %s5, %s3
  $region1: #{tpu_custom_call.1} parent=0
    #allocation2 [shape = 'u8[16384]{0}', space=vmem, size = 0x4000, scoped, tag = 'input window, operand 0, single buffered']
    #allocation3 [shape = 's32[1]{0}', space=sflag, size = 0x4, scoped, tag = 'scoped memory for tpu_custom_call.1']
    #allocation4 [shape = 's32[1]{0}', space=sflag, size = 0x4, scoped, tag = 'scoped memory for tpu_custom_call.1']
    #allocation5 [shape = 'u8[16384]{0}', space=vmem, size = 0x4000, scoped, tag = 'input window, operand 1, single buffered']
    #allocation6 [shape = 's32[1]{0}', space=sflag, size = 0x4, scoped, tag = 'scoped memory for tpu_custom_call.1']
    #allocation7 [shape = 'u8[512]{0}', space=vmem, size = 0x400, scoped, tag = 'output window, operand 0, single buffered']
    %7 = vsyncpa [#allocation3], 0
    %8 = vsyncpa [#allocation6], 0
    %9 = vsyncpa [#allocation4], 0
    // Predicated region
    $region2: #{tpu_custom_call.1} parent=1 // pred_check
      _
    $region3: #{tpu_custom_call.1} parent=1 // pred_check_branch
      %11 = sbr.rel (0) target = $region5
    $region4: #{tpu_custom_call.1} parent=1 // pred_region
      %s13 = ssub.s32 512, 512
      %14 = vsyncadd [#allocation3], %s13
      %s15 = sshll.u32 [#allocation2], 4
      %s16 = int_to_ptr.vmem [resolvable:$true] %s15
      %21 = dma.hbm_to_vmem [thread:$0]  %s0, 512, %s16, [#allocation3], 256, 256, 16
    $region5: #{tpu_custom_call.1} parent=1 // pred_fallthru
      _
    // Predicated region
    $region6: #{tpu_custom_call.1} parent=1 // pred_check
      _
    $region7: #{tpu_custom_call.1} parent=1 // pred_check_branch
      %23 = sbr.rel (0) target = $region9
    $region8: #{tpu_custom_call.1} parent=1 // pred_region
      %s25 = ssub.s32 512, 512
      %26 = vsyncadd [#allocation6], %s25
      %s27 = sshll.u32 [#allocation5], 4
      %s28 = int_to_ptr.vmem [resolvable:$true] %s27
      %33 = dma.hbm_to_vmem [thread:$0]  %s1, 512, %s28, [#allocation6], 256, 256, 16
    $region9: #{tpu_custom_call.1} parent=1 // pred_fallthru
      _
    // Predicated region
    $region10: #{tpu_custom_call.1} parent=1 // pred_check
      _
    $region11: #{tpu_custom_call.1} parent=1 // pred_check_branch
      %35 = sbr.rel (0) target = $region13
    $region12: #{tpu_custom_call.1} parent=1 // pred_region
      %36 = dma.done [#allocation3], 512
    $region13: #{tpu_custom_call.1} parent=1 // pred_fallthru
      _
    // Predicated region
    $region14: #{tpu_custom_call.1} parent=1 // pred_check
      _
    $region15: #{tpu_custom_call.1} parent=1 // pred_check_branch
      %38 = sbr.rel (0) target = $region17
    $region16: #{tpu_custom_call.1} parent=1 // pred_region
      %39 = dma.done [#allocation6], 512
    $region17: #{tpu_custom_call.1} parent=1 // pred_fallthru
      _
    %v40 = vld [vmem:[#allocation2] sm:$0xff]
    %v41 = vld [vmem:[#allocation2 + $0x8] sm:$0xff]
    %v42 = vld [vmem:[#allocation2 + $0x10] sm:$0xf]
    %v43 = vld [vmem:[#allocation2 + $0x18] sm:$0xf]
    %v44 = vld [vmem:[#allocation5] sm:$0xff]
    %v45 = vld [vmem:[#allocation5 + $0x8] sm:$0xff]
    %v46 = vld [vmem:[#allocation5 + $0x10] sm:$0xf]
    %v47 = vld [vmem:[#allocation5 + $0x18] sm:$0xf]
    %v48 = vmax.f32 %v40, %v41
    %49 = vmax.xlane.f32.xlu0 %v48
    %v50 = vpop.xlane.xlu0 %49
    %vm51 = vcmask 1043456
    %v52 = vsel %vm51, %v42, -inf
    %v53 = vsel %vm51, %v43, -inf
    %v54 = vmax.f32 %v52, %v53
    %55 = vmax.xlane.f32.xlu0 %v54
    %v56 = vpop.xlane.xlu0 %55
    %v57 = vsub.f32 %v40, %v50
    %v58 = vsub.f32 %v41, %v50
    %v59 = vsub.f32 %v42, %v56
    %v60 = vsub.f32 %v43, %v56
    %v61 = vmul.f32 %v57, 1.442695
    %v62 = vpow.pop %v61
    %v63 = vmul.f32 %v58, 1.442695
    %v64 = vpow.pop %v63
    %v65 = vmul.f32 %v59, 1.442695
    %v66 = vpow.pop %v65
    %v67 = vmul.f32 %v60, 1.442695
    %v68 = vpow.pop %v67
    %v69 = vadd.f32 %v62, %v64
    %70 = vadd.xlane.f32.xlu0 %v69
    %v71 = vpop.xlane.xlu0 %70
    %v72 = vsel %vm51, %v66, 0.0
    %v73 = vsel %vm51, %v68, 0.0
    %v74 = vadd.f32 %v72, %v73
    %75 = vadd.xlane.f32.xlu0 %v74
    %v76 = vpop.xlane.xlu0 %75
    %v77 = vlog2.pop %v71
    %v78 = vmul.f32 %v77, 0.6931472
    %v79 = vlog2.pop %v76
    %v80 = vmul.f32 %v79, 0.6931472
    %v81 = vadd.f32 %v50, %v78
    %v82 = vadd.f32 %v56, %v80
    %v83 = vsub.f32 %v81, %v40
    %v84 = vsub.f32 %v81, %v41
    %v85 = vsub.f32 %v82, %v42
    %v86 = vsub.f32 %v82, %v43
    %v87 = vmul.f32 %v44, %v83
    %v88 = vmul.f32 %v45, %v84
    %v89 = vmul.f32 %v46, %v85
    %v90 = vmul.f32 %v47, %v86
    %v91 = vadd.f32 %v87, %v88
    %92 = vadd.xlane.f32.xlu0 %v91
    %v93 = vpop.xlane.xlu0 %92
    %v94 = vsel %vm51, %v89, 0.0
    %v95 = vsel %vm51, %v90, 0.0
    %v96 = vadd.f32 %v94, %v95
    %97 = vadd.xlane.f32.xlu0 %v96
    %v98 = vpop.xlane.xlu0 %97
    %s99 = smul.u32 0, 12
    %v100 = vlaneseq
    %v101 = vshrl.u32 %v100, 7
    %v102 = vadd.s32 %v101, 8
    %v103 = vstv %s99
    %v104 = vadd.s32 %v101, %v103
    %v105 = vadd.s32 %v102, %v103
    %vm106 = vcmp.lt.s32.totalorder %v104, 12
    %vm107 = vcmp.lt.s32.totalorder %v105, 12
    %v108 = vsel %vm106, %v93, 0.0
    %v109 = vsel %vm107, %v98, 0.0
    %110 = vxpose.xlu0.b32.start [1/16] %v108, 128
    %111 = vxpose.xlu0.b32.cont [2/16] %v109, 128
    %112 = vxpose.xlu0.b32.cont [3/16] 0.0, 128
    %113 = vxpose.xlu0.b32.cont [4/16] 0.0, 128
    %114 = vxpose.xlu0.b32.cont [5/16] 0.0, 128
    %115 = vxpose.xlu0.b32.cont [6/16] 0.0, 128
    %116 = vxpose.xlu0.b32.cont [7/16] 0.0, 128
    %117 = vxpose.xlu0.b32.cont [8/16] 0.0, 128
    %118 = vxpose.xlu0.b32.cont [9/16] 0.0, 128
    %119 = vxpose.xlu0.b32.cont [10/16] 0.0, 128
    %120 = vxpose.xlu0.b32.cont [11/16] 0.0, 128
    %121 = vxpose.xlu0.b32.cont [12/16] 0.0, 128
    %122 = vxpose.xlu0.b32.cont [13/16] 0.0, 128
    %123 = vxpose.xlu0.b32.cont [14/16] 0.0, 128
    %124 = vxpose.xlu0.b32.cont [15/16] 0.0, 128
    %125 = vxpose.xlu0.b32.end [16/16] 0.0, 128
    %v126 = vpop.trf.xlu0
    %v127 = vpop.trf.xlu0
    %v128 = vpop.trf.xlu0
    %v129 = vpop.trf.xlu0
    %v130 = vpop.trf.xlu0
    %v131 = vpop.trf.xlu0
    %v132 = vpop.trf.xlu0
    %v133 = vpop.trf.xlu0
    %v134 = vpop.trf.xlu0
    %v135 = vpop.trf.xlu0
    %v136 = vpop.trf.xlu0
    %v137 = vpop.trf.xlu0
    %v138 = vpop.trf.xlu0
    %v139 = vpop.trf.xlu0
    %v140 = vpop.trf.xlu0
    %v141 = vpop.trf.xlu0
    %vm142 = vcmask 90112
    %143 = vst.msk [vmem:[#allocation7] sm:$0x1] %vm142, %v126
    // Predicated region
    $region18: #{tpu_custom_call.1} parent=1 // pred_check
      _
    $region19: #{tpu_custom_call.1} parent=1 // pred_check_branch
      %145 = sbr.rel (0) target = $region21
    $region20: #{tpu_custom_call.1} parent=1 // pred_region
      %s147 = ssub.s32 16, 16
      %148 = vsyncadd [#allocation4], %s147
      %s150 = sshll.u32 [#allocation7], 4
      %s151 = int_to_ptr.vmem [resolvable:$true] %s150
      %153 = dma.vmem_to_hbm [thread:$0]  %s151, 16, %s2, [#allocation4]
    $region21: #{tpu_custom_call.1} parent=1 // pred_fallthru
      _
    // Predicated region
    $region22: #{tpu_custom_call.1} parent=1 // pred_check
      _
    $region23: #{tpu_custom_call.1} parent=1 // pred_check_branch
      %155 = sbr.rel (0) target = $region25
    $region24: #{tpu_custom_call.1} parent=1 // pred_region
      %156 = dma.done [#allocation4], 16
    $region25: #{tpu_custom_call.1} parent=1 // pred_fallthru
      _
    %157 = vsyncpa [#allocation3], 1
    %158 = vsyncpa [#allocation6], 1
    %159 = vsyncpa [#allocation4], 1

</llo_original>
